<compile_context>
chip_gen: v6e
topology: v6e:2x2x1
jax: 0.10.0
libtpu: 0.0.40
codegen_flags: <defaults>
</compile_context>

<pallas_src>
import functools

import jax
import jax.numpy as jnp
from jax.experimental import pallas as pl
from jax.experimental.pallas import tpu as pltpu


def _round_up(x, m):
    return ((x + m - 1) // m) * m


def _wordchar_kernel(char_ids_ref, word_emb_ref, gtab_ref, bias_ref, out_ref,
                     *, F, Vc_pad, ks):
    """One row-tile of the fused word+char embedding forward.

    char_ids_ref : [TN, C]        int32  char token ids
    word_emb_ref : [TN, Dw]       bf16   pre-gathered word embeddings
    gtab_ref     : [Vc_pad, Ftot] bf16   folded (char_tab @ conv_w) table
    bias_ref     : [1, nks*F]     f32    per-ngram conv biases (concatenated)
    out_ref      : [TN, Dout]     f32
    """
    TN, C = char_ids_ref.shape

    # ---- fused gather + conv weights: one selection matmul on the MXU ----
    # P[n, c, off_k + tau*F + f] = sum_d char_tab[ids[n,c], d] * W_k[f, d, tau]
    ids = char_ids_ref[...]                                             # [TN, C] i32
    lane_iota = jax.lax.broadcasted_iota(jnp.int32, (1, 1, Vc_pad), 2)  # tiny iota
    one_hot = (ids[:, :, None] == lane_iota).astype(jnp.bfloat16)       # [TN, C, Vc_pad]
    # NOTE: out-of-range char ids select an all-zero row (silent zero embedding).
    P = jax.lax.dot_general(
        one_hot, gtab_ref[...],
        dimension_numbers=(((2,), (0,)), ((), ())),
        preferred_element_type=jnp.float32)                             # [TN, C, Ftot]

    bias = bias_ref[...]                                                # [1, nks*F]
    pieces = [word_emb_ref[...].astype(jnp.float32)]                    # [TN, Dw]

    # ---- per-ngram conv = tau-shifted adds + bias + ReLU + max-over-time ----
    off = 0
    for idx, k in enumerate(ks):
        L = C - k + 1
        acc = P[:, 0:L, off:off + F]                                    # [TN, L, F]
        for tau in range(1, k):
            acc = acc + P[:, tau:tau + L, off + tau * F:off + (tau + 1) * F]
        b = bias[:, idx * F:(idx + 1) * F]                              # [1, F]
        act = jnp.maximum(acc + b[:, None, :], 0.0)                     # ReLU
        pieces.append(jnp.max(act, axis=1))                             # [TN, F]
        off += k * F

    out_ref[...] = jnp.concatenate(pieces, axis=-1)                     # single store, Dout lanes


def word_char_embed_forward(tokens, char_tokens, params, *, char_kernel_sizes,
                            tile_n=512):
    """tokens: [B, S] int32, char_tokens: [B, S, C] int32 -> [B, S, Dw + F*nks] f32."""
    word_tab = params["word_emb"]          # [Vw, Dw] f32
    char_tab = params["char_emb"]          # [Vc, Dc] f32
    B, S = tokens.shape
    C = char_tokens.shape[-1]
    Vc, Dc = char_tab.shape
    Dw = word_tab.shape[1]
    F = params["conv_b"][0].shape[-1]
    ks = tuple(int(k) for k in char_kernel_sizes)
    nks = len(ks)
    Dout = Dw + F * nks
    Ftot = sum(ks) * F
    Vc_pad = _round_up(Vc, 128)            # lane-aligned one-hot / folded table
    N = B * S

    # Word gather stays outside the kernel (word vocab may be large); stream it
    # in bf16 to halve that HBM stream. Char gather is fused into the kernel.
    word_emb = jnp.take(word_tab, tokens.reshape(N), axis=0).astype(jnp.bfloat16)
    char_ids = char_tokens.reshape(N, C).astype(jnp.int32)              # [N, C]

    # Fold char table into the conv weights (host, f32) then cast to bf16:
    #   G_{k,tau} = char_tab @ W_k[:, :, tau].T   -> concat over (k, tau)
    g_blocks = []
    for w, k in zip(params["conv_w"], ks):                               # w: [F, Dc, k]
        for tau in range(k):
            g_blocks.append(char_tab @ w[:, :, tau].T)                   # [Vc, F]
    G = jnp.concatenate(g_blocks, axis=-1)                               # [Vc, Ftot]
    G = jnp.pad(G, ((0, Vc_pad - Vc), (0, 0))).astype(jnp.bfloat16)      # [Vc_pad, Ftot]
    bias = jnp.concatenate([b.reshape(1, F) for b in params["conv_b"]],
                           axis=-1).astype(jnp.float32)                  # [1, nks*F]

    # Tile sizing: big tiles, rounded to bf16 sublane-pack granularity (16),
    # clamped so the grid keeps >= 8 steps (>= 4 per v7x TensorCore) so the
    # BlockSpec double-buffering can overlap DMA with compute.
    tgt = _round_up(pl.cdiv(N, 8), 16)
    tile_n_eff = max(16, min(_round_up(tile_n, 16), tgt))
    grid = (pl.cdiv(N, tile_n_eff),)

    kern = functools.partial(_wordchar_kernel, F=F, Vc_pad=Vc_pad, ks=ks)

    # Advisory cost estimate: one selection matmul dominates compute.
    flops = 2 * N * C * Vc_pad * Ftot
    bytes_accessed = (N * C * 4 + N * Dw * 2 + N * Dout * 4
                      + G.size * 2 + bias.size * 4)

    out = pl.pallas_call(
        kern,
        out_shape=jax.ShapeDtypeStruct((N, Dout), jnp.float32),
        grid_spec=pltpu.PrefetchScalarGridSpec(
            num_scalar_prefetch=0,
            grid=grid,
            in_specs=[
                pl.BlockSpec((tile_n_eff, C), lambda i: (i, 0)),     # char ids
                pl.BlockSpec((tile_n_eff, Dw), lambda i: (i, 0)),    # word emb rows (bf16)
                pl.BlockSpec((Vc_pad, Ftot), lambda i: (0, 0)),      # folded table (resident)
                pl.BlockSpec((1, nks * F), lambda i: (0, 0)),        # conv biases
            ],
            out_specs=pl.BlockSpec((tile_n_eff, Dout), lambda i: (i, 0)),
        ),
        compiler_params=pltpu.CompilerParams(
            dimension_semantics=("parallel",),
            vmem_limit_bytes=32 * 1024 * 1024),
        cost_estimate=pl.CostEstimate(flops=flops, transcendentals=0,
                                      bytes_accessed=bytes_accessed),
    )(char_ids, word_emb, G, bias)

    return out.reshape(B, S, Dout)


def ref_forward(tokens, char_tokens, params, char_kernel_sizes):
    """Pure-JAX f32 reference mirroring the PyTorch module (NCW conv)."""
    word_tab = params["word_emb"]
    char_tab = params["char_emb"]
    B, S = tokens.shape
    C = char_tokens.shape[-1]
    Dw = word_tab.shape[1]
    F = params["conv_b"][0].shape[-1]
    N = B * S

    word_emb = word_tab[tokens.reshape(N)]                       # [N, Dw]
    char_emb = char_tab[char_tokens.reshape(N, C)]               # [N, C, Dc]
    x = jnp.transpose(char_emb, (0, 2, 1))                       # NCW: [N, Dc, C]

    reps = [word_emb]
    for w, b, k in zip(params["conv_w"], params["conv_b"], char_kernel_sizes):
        y = jax.lax.conv_general_dilated(
            x, w, window_strides=(1,), padding="VALID",
            dimension_numbers=("NCH", "OIH", "NCH"))             # [N, F, C-k+1]
        y = y + b.reshape(1, F, 1)
        y = jnp.maximum(y, 0.0)
        reps.append(jnp.max(y, axis=-1))                         # [N, F]
    out = jnp.concatenate(reps, axis=-1)
    return out.reshape(B, S, -1)


if __name__ == "__main__":
    # Small shapes consistent with the module's forward.
    B, S, C = 2, 8, 16           # batch, seq len, chars per token
    Vw, Vc = 100, 60             # word / char vocab sizes
    Dw, Dc, F = 32, 16, 32       # word dims, char dims, char_output_channels
    char_kernel_sizes = (2, 3)   # char_kernel_sizes
    pad_w = pad_c = 0            # padding indices

    key = jax.random.PRNGKey(0)
    k_wt, k_ct, k_w0, k_b0, k_w1, k_b1, k_tok, k_chr = jax.random.split(key, 8)

    word_emb = 0.1 * jax.random.normal(k_wt, (Vw, Dw), jnp.float32)
    word_emb = word_emb.at[pad_w].set(0.0)           # padding_idx row is zero
    char_emb = 0.1 * jax.random.normal(k_ct, (Vc, Dc), jnp.float32)
    char_emb = char_emb.at[pad_c].set(0.0)

    params = {
        "word_emb": word_emb,
        "char_emb": char_emb,
        # PyTorch Conv1d weight layout [out_channels, in_channels, kernel_size]
        "conv_w": [
            0.1 * jax.random.normal(k_w0, (F, Dc, char_kernel_sizes[0]), jnp.float32),
            0.1 * jax.random.normal(k_w1, (F, Dc, char_kernel_sizes[1]), jnp.float32),
        ],
        "conv_b": [
            0.1 * jax.random.normal(k_b0, (1, F), jnp.float32),
            0.1 * jax.random.normal(k_b1, (1, F), jnp.float32),
        ],
    }

    tokens = jax.random.randint(k_tok, (B, S), 0, Vw, dtype=jnp.int32)
    char_tokens = jax.random.randint(k_chr, (B, S, C), 0, Vc, dtype=jnp.int32)

    out = word_char_embed_forward(tokens, char_tokens, params,
                                  char_kernel_sizes=char_kernel_sizes)
    out = jax.block_until_ready(out)

    ref = ref_forward(tokens, char_tokens, params, char_kernel_sizes)
    assert out.shape == (B, S, Dw + F * len(char_kernel_sizes)), out.shape
    # Folded table / word stream are bf16 inside the kernel (f32 accumulation),
    # so allow a small bf16-rounding tolerance vs the pure-f32 reference.
    max_err = float(jnp.max(jnp.abs(out - ref)))
    assert jnp.allclose(out, ref, atol=1e-2, rtol=1e-2), max_err

    print("KERNEL_OK")
</pallas_src>

<mosaic_0001>
module attributes {stable_mosaic.version = 11 : i64} {
  func.func @_wordchar_kernel(%arg0: i32, %arg1: memref<16x16xi32, #tpu.memory_space<vmem>>, %arg2: memref<16x32xbf16, #tpu.memory_space<vmem>>, %arg3: memref<128x160xbf16, #tpu.memory_space<vmem>>, %arg4: memref<1x64xf32, #tpu.memory_space<vmem>>, %arg5: memref<16x96xf32, #tpu.memory_space<vmem>>) attributes {dimension_semantics = [#tpu.dimension_semantics<parallel>], iteration_bounds = array<i64: 1>, scalar_prefetch = 0 : i64, scratch_operands = 0 : i64, tpu.core_type = #tpu.core_type<tc>, window_params = [{transform_indices = @transform_0, window_bounds = array<i64: 16, 16>}, {transform_indices = @transform_1, window_bounds = array<i64: 16, 32>}, {pipeline_mode = #tpu.pipeline_mode<synchronous>, transform_indices = @transform_2, window_bounds = array<i64: 128, 160>}, {pipeline_mode = #tpu.pipeline_mode<synchronous>, transform_indices = @transform_3, window_bounds = array<i64: 1, 64>}, {transform_indices = @transform_4, window_bounds = array<i64: 16, 96>}]} {
    %c0 = arith.constant 0 : index
    %c0_0 = arith.constant 0 : index
    %0 = vector.load %arg1[%c0, %c0_0] : memref<16x16xi32, #tpu.memory_space<vmem>>, vector<16x16xi32>
    %1 = tpu.iota {dimensions = array<i32: 2>} : vector<1x1x128xi32>
    %2 = vector.shape_cast %0 : vector<16x16xi32> to vector<16x16x1xi32>
    %3 = vector.broadcast %2 : vector<16x16x1xi32> to vector<16x16x128xi32>
    %4 = vector.broadcast %1 : vector<1x1x128xi32> to vector<16x16x128xi32>
    %5 = arith.cmpi eq, %3, %4 : vector<16x16x128xi32>
    %6 = arith.extui %5 : vector<16x16x128xi1> to vector<16x16x128xi32>
    %7 = arith.sitofp %6 : vector<16x16x128xi32> to vector<16x16x128xf32>
    %8 = arith.truncf %7 : vector<16x16x128xf32> to vector<16x16x128xbf16>
    %c0_1 = arith.constant 0 : index
    %c0_2 = arith.constant 0 : index
    %9 = vector.load %arg3[%c0_1, %c0_2] : memref<128x160xbf16, #tpu.memory_space<vmem>>, vector<128x160xbf16>
    %cst = arith.constant dense<0.000000e+00> : vector<16x16x160xf32>
    %10 = tpu.matmul %8, %9, %cst {dimension_numbers = #tpu.dot_dimension_numbers<[2], [0], [0, 1], [1], [0, 0, 0, 1, 1, 1], [], []>} : vector<16x16x128xbf16>, vector<128x160xbf16>, vector<16x16x160xf32> -> vector<16x16x160xf32>
    %c0_3 = arith.constant 0 : index
    %c0_4 = arith.constant 0 : index
    %11 = vector.load %arg4[%c0_3, %c0_4] : memref<1x64xf32, #tpu.memory_space<vmem>>, vector<1x64xf32>
    %c0_5 = arith.constant 0 : index
    %c0_6 = arith.constant 0 : index
    %12 = vector.load %arg2[%c0_5, %c0_6] : memref<16x32xbf16, #tpu.memory_space<vmem>>, vector<16x32xbf16>
    %13 = arith.extf %12 : vector<16x32xbf16> to vector<16x32xf32>
    %14 = vector.extract_strided_slice %10 {offsets = [0, 0, 0], sizes = [16, 15, 32], strides = [1, 1, 1]} : vector<16x16x160xf32> to vector<16x15x32xf32>
    %15 = vector.extract_strided_slice %10 {offsets = [0, 1, 32], sizes = [16, 15, 32], strides = [1, 1, 1]} : vector<16x16x160xf32> to vector<16x15x32xf32>
    %16 = arith.addf %14, %15 : vector<16x15x32xf32>
    %17 = vector.extract_strided_slice %11 {offsets = [0, 0], sizes = [1, 32], strides = [1, 1]} : vector<1x64xf32> to vector<1x32xf32>
    %18 = vector.shape_cast %17 : vector<1x32xf32> to vector<1x1x32xf32>
    %19 = vector.broadcast %18 : vector<1x1x32xf32> to vector<16x15x32xf32>
    %20 = arith.addf %16, %19 : vector<16x15x32xf32>
    %cst_7 = arith.constant 0.000000e+00 : f32
    %21 = vector.broadcast %cst_7 : f32 to vector<16x15x32xf32>
    %22 = arith.maximumf %20, %21 : vector<16x15x32xf32>
    %cst_8 = arith.constant dense<0xFF800000> : vector<16x32xf32>
    %23 = vector.multi_reduction <maximumf>, %22, %cst_8 [1] : vector<16x15x32xf32> to vector<16x32xf32>
    %24 = vector.extract_strided_slice %10 {offsets = [0, 0, 64], sizes = [16, 14, 32], strides = [1, 1, 1]} : vector<16x16x160xf32> to vector<16x14x32xf32>
    %25 = vector.extract_strided_slice %10 {offsets = [0, 1, 96], sizes = [16, 14, 32], strides = [1, 1, 1]} : vector<16x16x160xf32> to vector<16x14x32xf32>
    %26 = arith.addf %24, %25 : vector<16x14x32xf32>
    %27 = vector.extract_strided_slice %10 {offsets = [0, 2, 128], sizes = [16, 14, 32], strides = [1, 1, 1]} : vector<16x16x160xf32> to vector<16x14x32xf32>
    %28 = arith.addf %26, %27 : vector<16x14x32xf32>
    %29 = vector.extract_strided_slice %11 {offsets = [0, 32], sizes = [1, 32], strides = [1, 1]} : vector<1x64xf32> to vector<1x32xf32>
    %30 = vector.shape_cast %29 : vector<1x32xf32> to vector<1x1x32xf32>
    %31 = vector.broadcast %30 : vector<1x1x32xf32> to vector<16x14x32xf32>
    %32 = arith.addf %28, %31 : vector<16x14x32xf32>
    %cst_9 = arith.constant 0.000000e+00 : f32
    %33 = vector.broadcast %cst_9 : f32 to vector<16x14x32xf32>
    %34 = arith.maximumf %32, %33 : vector<16x14x32xf32>
    %cst_10 = arith.constant dense<0xFF800000> : vector<16x32xf32>
    %35 = vector.multi_reduction <maximumf>, %34, %cst_10 [1] : vector<16x14x32xf32> to vector<16x32xf32>
    %36 = tpu.concatenate %13, %23, %35 in 1 : vector<16x32xf32>, vector<16x32xf32>, vector<16x32xf32> -> vector<16x96xf32>
    %c0_11 = arith.constant 0 : index
    %c0_12 = arith.constant 0 : index
    %37 = vector.load %arg5[%c0_11, %c0_12] : memref<16x96xf32, #tpu.memory_space<vmem>>, vector<16x96xf32>
    tpu.vector_store %arg5[%c0_11, %c0_12], %36 {strides = array<i32>} : memref<16x96xf32, #tpu.memory_space<vmem>>, vector<16x96xf32>,
    return
  }
  func.func @transform_0(%arg0: i32) -> (i32, i32) {
    %c0_i32 = arith.constant 0 : i32
    %c0_i32_0 = arith.constant 0 : i32
    return %arg0, %c0_i32 : i32, i32
  }
  func.func @transform_1(%arg0: i32) -> (i32, i32) {
    %c0_i32 = arith.constant 0 : i32
    %c0_i32_0 = arith.constant 0 : i32
    return %arg0, %c0_i32 : i32, i32
  }
  func.func @transform_2(%arg0: i32) -> (i32, i32) {
    %c0_i32 = arith.constant 0 : i32
    %c0_i32_0 = arith.constant 0 : i32
    %c0_i32_1 = arith.constant 0 : i32
    return %c0_i32, %c0_i32_0 : i32, i32
  }
  func.func @transform_3(%arg0: i32) -> (i32, i32) {
    %c0_i32 = arith.constant 0 : i32
    %c0_i32_0 = arith.constant 0 : i32
    %c0_i32_1 = arith.constant 0 : i32
    return %c0_i32, %c0_i32_0 : i32, i32
  }
  func.func @transform_4(%arg0: i32) -> (i32, i32) {
    %c0_i32 = arith.constant 0 : i32
    %c0_i32_0 = arith.constant 0 : i32
    return %arg0, %c0_i32 : i32, i32
  }
}

</mosaic_0001>

<llo_original>
// kernel: tpu_custom_call.1
$region0: #{tpu_custom_call.1}
  #allocation0 [shape = 'u32[]', space=smem, size = 0x4, offset = 0x4, fixed_abs, tag = 'smem constant byte address 0x4 - core index']
  #allocation1 [shape = 'u32[144,128]{1,0:T(1,128)}', space=vmem, size = 0x12000, scoped, tag = 'internal scratch']
  %s0 = inlined_call_operand.vmem [shape: s32[16,16], index: 0, kind: input, shape index: {}]
  %s1 = inlined_call_operand.vmem [shape: bf16[16,32], index: 1, kind: input, shape index: {}]
  %s2 = inlined_call_operand.vmem [shape: bf16[128,160], index: 2, kind: input, shape index: {}]
  %s3 = inlined_call_operand.vmem [shape: f32[1,64], index: 3, kind: input, shape index: {}]
  %s4 = inlined_call_operand.hbm [shape: f32[16,96], index: 4, kind: output, shape index: {}]
  %s5 = sld [smem:[#allocation0]]
  $region26: #{tpu_custom_call.1} parent=0
    _
  %s7 = ssub.s32 1, %s5
  %s8 = scalar_select 0, %s7, %s5
  $region1: #{tpu_custom_call.1} parent=0
    #allocation2 [shape = 'u8[8192]{0}', space=vmem, size = 0x2000, scoped, tag = 'output window, operand 0, single buffered']
    #allocation3 [shape = 's32[1]{0}', space=sflag, size = 0x4, scoped, tag = 'scoped memory for tpu_custom_call.1']
    %9 = vsyncpa [#allocation3], 0
    // Predicated region
    $region2: #{tpu_custom_call.1} parent=1 // pred_check
      _
    $region3: #{tpu_custom_call.1} parent=1 // pred_check_branch
      %11 = sbr.rel (0) target = $region5
    $region4: #{tpu_custom_call.1} parent=1 // pred_region
      _
    $region5: #{tpu_custom_call.1} parent=1 // pred_fallthru
      _
    // Predicated region
    $region6: #{tpu_custom_call.1} parent=1 // pred_check
      _
    $region7: #{tpu_custom_call.1} parent=1 // pred_check_branch
      %13 = sbr.rel (0) target = $region9
    $region8: #{tpu_custom_call.1} parent=1 // pred_region
      _
    $region9: #{tpu_custom_call.1} parent=1 // pred_fallthru
      _
    // Predicated region
    $region10: #{tpu_custom_call.1} parent=1 // pred_check
      _
    $region11: #{tpu_custom_call.1} parent=1 // pred_check_branch
      %15 = sbr.rel (0) target = $region13
    $region12: #{tpu_custom_call.1} parent=1 // pred_region
      _
    $region13: #{tpu_custom_call.1} parent=1 // pred_fallthru
      _
    // Predicated region
    $region14: #{tpu_custom_call.1} parent=1 // pred_check
      _
    $region15: #{tpu_custom_call.1} parent=1 // pred_check_branch
      %17 = sbr.rel (0) target = $region17
    $region16: #{tpu_custom_call.1} parent=1 // pred_region
      _
    $region17: #{tpu_custom_call.1} parent=1 // pred_fallthru
      _
    %v19 = vld [vmem:[%s0] sm:$0xff]
    %v20 = vld [vmem:[%s0 + $0x8] sm:$0xff]
    %v21 = vlaneseq
    %v22 = vand.u32 %v21, 127
    %v23 = vlaneseq
    %v24 = vshrl.u32 %v23, 7
    %v25 = vsub.s32 0, %v24
    %v26 = vrot.slane %v19, %v25
    %28 = vbcast.lane.b32.xlu0 %v26, 256
    %v29 = vpop.permute.xlu0 %28
    %s31 = sor.u32 256, 8
    %32 = vbcast.lane.b32.xlu0 %v26, %s31
    %v33 = vpop.permute.xlu0 %32
    %v34 = vlaneseq
    %v35 = vshrl.u32 %v34, 7
    %v36 = vsub.s32 1, %v35
    %v37 = vrot.slane %v19, %v36
    %39 = vbcast.lane.b32.xlu0 %v37, 256
    %v40 = vpop.permute.xlu0 %39
    %s42 = sor.u32 256, 8
    %43 = vbcast.lane.b32.xlu0 %v37, %s42
    %v44 = vpop.permute.xlu0 %43
    %v45 = vlaneseq
    %v46 = vshrl.u32 %v45, 7
    %v47 = vsub.s32 2, %v46
    %v48 = vrot.slane %v19, %v47
    %50 = vbcast.lane.b32.xlu0 %v48, 256
    %v51 = vpop.permute.xlu0 %50
    %s53 = sor.u32 256, 8
    %54 = vbcast.lane.b32.xlu0 %v48, %s53
    %v55 = vpop.permute.xlu0 %54
    %v56 = vlaneseq
    %v57 = vshrl.u32 %v56, 7
    %v58 = vsub.s32 3, %v57
    %v59 = vrot.slane %v19, %v58
    %61 = vbcast.lane.b32.xlu0 %v59, 256
    %v62 = vpop.permute.xlu0 %61
    %s64 = sor.u32 256, 8
    %65 = vbcast.lane.b32.xlu0 %v59, %s64
    %v66 = vpop.permute.xlu0 %65
    %v67 = vlaneseq
    %v68 = vshrl.u32 %v67, 7
    %v69 = vsub.s32 4, %v68
    %v70 = vrot.slane %v19, %v69
    %72 = vbcast.lane.b32.xlu0 %v70, 256
    %v73 = vpop.permute.xlu0 %72
    %s75 = sor.u32 256, 8
    %76 = vbcast.lane.b32.xlu0 %v70, %s75
    %v77 = vpop.permute.xlu0 %76
    %v78 = vlaneseq
    %v79 = vshrl.u32 %v78, 7
    %v80 = vsub.s32 5, %v79
    %v81 = vrot.slane %v19, %v80
    %83 = vbcast.lane.b32.xlu0 %v81, 256
    %v84 = vpop.permute.xlu0 %83
    %s86 = sor.u32 256, 8
    %87 = vbcast.lane.b32.xlu0 %v81, %s86
    %v88 = vpop.permute.xlu0 %87
    %v89 = vlaneseq
    %v90 = vshrl.u32 %v89, 7
    %v91 = vsub.s32 6, %v90
    %v92 = vrot.slane %v19, %v91
    %94 = vbcast.lane.b32.xlu0 %v92, 256
    %v95 = vpop.permute.xlu0 %94
    %s97 = sor.u32 256, 8
    %98 = vbcast.lane.b32.xlu0 %v92, %s97
    %v99 = vpop.permute.xlu0 %98
    %v100 = vlaneseq
    %v101 = vshrl.u32 %v100, 7
    %v102 = vsub.s32 7, %v101
    %v103 = vrot.slane %v19, %v102
    %105 = vbcast.lane.b32.xlu0 %v103, 256
    %v106 = vpop.permute.xlu0 %105
    %s108 = sor.u32 256, 8
    %109 = vbcast.lane.b32.xlu0 %v103, %s108
    %v110 = vpop.permute.xlu0 %109
    %v111 = vlaneseq
    %v112 = vshrl.u32 %v111, 7
    %v113 = vsub.s32 0, %v112
    %v114 = vrot.slane %v20, %v113
    %116 = vbcast.lane.b32.xlu0 %v114, 256
    %v117 = vpop.permute.xlu0 %116
    %s119 = sor.u32 256, 8
    %120 = vbcast.lane.b32.xlu0 %v114, %s119
    %v121 = vpop.permute.xlu0 %120
    %v122 = vlaneseq
    %v123 = vshrl.u32 %v122, 7
    %v124 = vsub.s32 1, %v123
    %v125 = vrot.slane %v20, %v124
    %127 = vbcast.lane.b32.xlu0 %v125, 256
    %v128 = vpop.permute.xlu0 %127
    %s130 = sor.u32 256, 8
    %131 = vbcast.lane.b32.xlu0 %v125, %s130
    %v132 = vpop.permute.xlu0 %131
    %v133 = vlaneseq
    %v134 = vshrl.u32 %v133, 7
    %v135 = vsub.s32 2, %v134
    %v136 = vrot.slane %v20, %v135
    %138 = vbcast.lane.b32.xlu0 %v136, 256
    %v139 = vpop.permute.xlu0 %138
    %s141 = sor.u32 256, 8
    %142 = vbcast.lane.b32.xlu0 %v136, %s141
    %v143 = vpop.permute.xlu0 %142
    %v144 = vlaneseq
    %v145 = vshrl.u32 %v144, 7
    %v146 = vsub.s32 3, %v145
    %v147 = vrot.slane %v20, %v146
    %149 = vbcast.lane.b32.xlu0 %v147, 256
    %v150 = vpop.permute.xlu0 %149
    %s152 = sor.u32 256, 8
    %153 = vbcast.lane.b32.xlu0 %v147, %s152
    %v154 = vpop.permute.xlu0 %153
    %v155 = vlaneseq
    %v156 = vshrl.u32 %v155, 7
    %v157 = vsub.s32 4, %v156
    %v158 = vrot.slane %v20, %v157
    %160 = vbcast.lane.b32.xlu0 %v158, 256
    %v161 = vpop.permute.xlu0 %160
    %s163 = sor.u32 256, 8
    %164 = vbcast.lane.b32.xlu0 %v158, %s163
    %v165 = vpop.permute.xlu0 %164
    %v166 = vlaneseq
    %v167 = vshrl.u32 %v166, 7
    %v168 = vsub.s32 5, %v167
    %v169 = vrot.slane %v20, %v168
    %171 = vbcast.lane.b32.xlu0 %v169, 256
    %v172 = vpop.permute.xlu0 %171
    %s174 = sor.u32 256, 8
    %175 = vbcast.lane.b32.xlu0 %v169, %s174
    %v176 = vpop.permute.xlu0 %175
    %v177 = vlaneseq
    %v178 = vshrl.u32 %v177, 7
    %v179 = vsub.s32 6, %v178
    %v180 = vrot.slane %v20, %v179
    %182 = vbcast.lane.b32.xlu0 %v180, 256
    %v183 = vpop.permute.xlu0 %182
    %s185 = sor.u32 256, 8
    %186 = vbcast.lane.b32.xlu0 %v180, %s185
    %v187 = vpop.permute.xlu0 %186
    %v188 = vlaneseq
    %v189 = vshrl.u32 %v188, 7
    %v190 = vsub.s32 7, %v189
    %v191 = vrot.slane %v20, %v190
    %193 = vbcast.lane.b32.xlu0 %v191, 256
    %v194 = vpop.permute.xlu0 %193
    %s196 = sor.u32 256, 8
    %197 = vbcast.lane.b32.xlu0 %v191, %s196
    %v198 = vpop.permute.xlu0 %197
    %vm199 = vcmp.eq.s32.totalorder %v29, %v22
    %vm200 = vcmp.eq.s32.totalorder %v33, %v22
    %vm201 = vcmp.eq.s32.totalorder %v40, %v22
    %vm202 = vcmp.eq.s32.totalorder %v44, %v22
    %vm203 = vcmp.eq.s32.totalorder %v51, %v22
    %vm204 = vcmp.eq.s32.totalorder %v55, %v22
    %vm205 = vcmp.eq.s32.totalorder %v62, %v22
    %vm206 = vcmp.eq.s32.totalorder %v66, %v22
    %vm207 = vcmp.eq.s32.totalorder %v73, %v22
    %vm208 = vcmp.eq.s32.totalorder %v77, %v22
    %vm209 = vcmp.eq.s32.totalorder %v84, %v22
    %vm210 = vcmp.eq.s32.totalorder %v88, %v22
    %vm211 = vcmp.eq.s32.totalorder %v95, %v22
    %vm212 = vcmp.eq.s32.totalorder %v99, %v22
    %vm213 = vcmp.eq.s32.totalorder %v106, %v22
    %vm214 = vcmp.eq.s32.totalorder %v110, %v22
    %vm215 = vcmp.eq.s32.totalorder %v117, %v22
    %vm216 = vcmp.eq.s32.totalorder %v121, %v22
    %vm217 = vcmp.eq.s32.totalorder %v128, %v22
    %vm218 = vcmp.eq.s32.totalorder %v132, %v22
    %vm219 = vcmp.eq.s32.totalorder %v139, %v22
    %vm220 = vcmp.eq.s32.totalorder %v143, %v22
    %vm221 = vcmp.eq.s32.totalorder %v150, %v22
    %vm222 = vcmp.eq.s32.totalorder %v154, %v22
    %vm223 = vcmp.eq.s32.totalorder %v161, %v22
    %vm224 = vcmp.eq.s32.totalorder %v165, %v22
    %vm225 = vcmp.eq.s32.totalorder %v172, %v22
    %vm226 = vcmp.eq.s32.totalorder %v176, %v22
    %vm227 = vcmp.eq.s32.totalorder %v183, %v22
    %vm228 = vcmp.eq.s32.totalorder %v187, %v22
    %vm229 = vcmp.eq.s32.totalorder %v194, %v22
    %vm230 = vcmp.eq.s32.totalorder %v198, %v22
    %v231 = vsel %vm199, 1, 0
    %v232 = vsel %vm200, 1, 0
    %v233 = vsel %vm201, 1, 0
    %v234 = vsel %vm202, 1, 0
    %v235 = vsel %vm203, 1, 0
    %v236 = vsel %vm204, 1, 0
    %v237 = vsel %vm205, 1, 0
    %v238 = vsel %vm206, 1, 0
    %v239 = vsel %vm207, 1, 0
    %v240 = vsel %vm208, 1, 0
    %v241 = vsel %vm209, 1, 0
    %v242 = vsel %vm210, 1, 0
    %v243 = vsel %vm211, 1, 0
    %v244 = vsel %vm212, 1, 0
    %v245 = vsel %vm213, 1, 0
    %v246 = vsel %vm214, 1, 0
    %v247 = vsel %vm215, 1, 0
    %v248 = vsel %vm216, 1, 0
    %v249 = vsel %vm217, 1, 0
    %v250 = vsel %vm218, 1, 0
    %v251 = vsel %vm219, 1, 0
    %v252 = vsel %vm220, 1, 0
    %v253 = vsel %vm221, 1, 0
    %v254 = vsel %vm222, 1, 0
    %v255 = vsel %vm223, 1, 0
    %v256 = vsel %vm224, 1, 0
    %v257 = vsel %vm225, 1, 0
    %v258 = vsel %vm226, 1, 0
    %v259 = vsel %vm227, 1, 0
    %v260 = vsel %vm228, 1, 0
    %v261 = vsel %vm229, 1, 0
    %v262 = vsel %vm230, 1, 0
    %v263 = vcvt.s32.f32 %v231
    %v264 = vcvt.s32.f32 %v232
    %v265 = vcvt.s32.f32 %v233
    %v266 = vcvt.s32.f32 %v234
    %v267 = vcvt.s32.f32 %v235
    %v268 = vcvt.s32.f32 %v236
    %v269 = vcvt.s32.f32 %v237
    %v270 = vcvt.s32.f32 %v238
    %v271 = vcvt.s32.f32 %v239
    %v272 = vcvt.s32.f32 %v240
    %v273 = vcvt.s32.f32 %v241
    %v274 = vcvt.s32.f32 %v242
    %v275 = vcvt.s32.f32 %v243
    %v276 = vcvt.s32.f32 %v244
    %v277 = vcvt.s32.f32 %v245
    %v278 = vcvt.s32.f32 %v246
    %v279 = vcvt.s32.f32 %v247
    %v280 = vcvt.s32.f32 %v248
    %v281 = vcvt.s32.f32 %v249
    %v282 = vcvt.s32.f32 %v250
    %v283 = vcvt.s32.f32 %v251
    %v284 = vcvt.s32.f32 %v252
    %v285 = vcvt.s32.f32 %v253
    %v286 = vcvt.s32.f32 %v254
    %v287 = vcvt.s32.f32 %v255
    %v288 = vcvt.s32.f32 %v256
    %v289 = vcvt.s32.f32 %v257
    %v290 = vcvt.s32.f32 %v258
    %v291 = vcvt.s32.f32 %v259
    %v292 = vcvt.s32.f32 %v260
    %v293 = vcvt.s32.f32 %v261
    %v294 = vcvt.s32.f32 %v262
    %v295 = vpack.c.bf16 %v264, %v263
    %v296 = vpack.c.bf16 %v266, %v265
    %v297 = vpack.c.bf16 %v268, %v267
    %v298 = vpack.c.bf16 %v270, %v269
    %v299 = vpack.c.bf16 %v272, %v271
    %v300 = vpack.c.bf16 %v274, %v273
    %v301 = vpack.c.bf16 %v276, %v275
    %v302 = vpack.c.bf16 %v278, %v277
    %v303 = vpack.c.bf16 %v280, %v279
    %v304 = vpack.c.bf16 %v282, %v281
    %v305 = vpack.c.bf16 %v284, %v283
    %v306 = vpack.c.bf16 %v286, %v285
    %v307 = vpack.c.bf16 %v288, %v287
    %v308 = vpack.c.bf16 %v290, %v289
    %v309 = vpack.c.bf16 %v292, %v291
    %v310 = vpack.c.bf16 %v294, %v293
    %v311 = vld [vmem:[%s2] sm:$0xff]
    %v312 = vld [vmem:[%s2 + $0x8] sm:$0xff]
    %v313 = vld [vmem:[%s2 + $0x10] sm:$0xff]
    %v314 = vld [vmem:[%s2 + $0x18] sm:$0xff]
    %v315 = vld [vmem:[%s2 + $0x20] sm:$0xff]
    %v316 = vld [vmem:[%s2 + $0x28] sm:$0xff]
    %v317 = vld [vmem:[%s2 + $0x30] sm:$0xff]
    %v318 = vld [vmem:[%s2 + $0x38] sm:$0xff]
    %v319 = vld [vmem:[%s2 + $0x40] sm:$0xff]
    %v320 = vld [vmem:[%s2 + $0x48] sm:$0xff]
    %v321 = vld [vmem:[%s2 + $0x50] sm:$0xff]
    %v322 = vld [vmem:[%s2 + $0x58] sm:$0xff]
    %v323 = vld [vmem:[%s2 + $0x60] sm:$0xff]
    %v324 = vld [vmem:[%s2 + $0x68] sm:$0xff]
    %v325 = vld [vmem:[%s2 + $0x70] sm:$0xff]
    %v326 = vld [vmem:[%s2 + $0x78] sm:$0xff]
    %v343 = vunpack.c.l.b16 %v311
    %v344 = vunpack.c.h.b16 %v311
    %v345 = vunpack.c.l.b16 %v312
    %v346 = vunpack.c.h.b16 %v312
    %v347 = vunpack.c.l.b16 %v313
    %v348 = vunpack.c.h.b16 %v313
    %v349 = vunpack.c.l.b16 %v314
    %v350 = vunpack.c.h.b16 %v314
    %v351 = vunpack.c.l.b16 %v315
    %v352 = vunpack.c.h.b16 %v315
    %v353 = vunpack.c.l.b16 %v316
    %v354 = vunpack.c.h.b16 %v316
    %v355 = vunpack.c.l.b16 %v317
    %v356 = vunpack.c.h.b16 %v317
    %v357 = vunpack.c.l.b16 %v318
    %v358 = vunpack.c.h.b16 %v318
    %v359 = vunpack.c.l.b16 %v319
    %v360 = vunpack.c.h.b16 %v319
    %v361 = vunpack.c.l.b16 %v320
    %v362 = vunpack.c.h.b16 %v320
    %v363 = vunpack.c.l.b16 %v321
    %v364 = vunpack.c.h.b16 %v321
    %v365 = vunpack.c.l.b16 %v322
    %v366 = vunpack.c.h.b16 %v322
    %v367 = vunpack.c.l.b16 %v323
    %v368 = vunpack.c.h.b16 %v323
    %v369 = vunpack.c.l.b16 %v324
    %v370 = vunpack.c.h.b16 %v324
    %v371 = vunpack.c.l.b16 %v325
    %v372 = vunpack.c.h.b16 %v325
    %v373 = vunpack.c.l.b16 %v326
    %v374 = vunpack.c.h.b16 %v326
    %v375 = vpack.c.b16 %v345, %v343
    %v376 = vpack.c.b16 %v346, %v344
    %v377 = vpack.c.b16 %v349, %v347
    %v378 = vpack.c.b16 %v350, %v348
    %v379 = vpack.c.b16 %v353, %v351
    %v380 = vpack.c.b16 %v354, %v352
    %v381 = vpack.c.b16 %v357, %v355
    %v382 = vpack.c.b16 %v358, %v356
    %v383 = vpack.c.b16 %v361, %v359
    %v384 = vpack.c.b16 %v362, %v360
    %v385 = vpack.c.b16 %v365, %v363
    %v386 = vpack.c.b16 %v366, %v364
    %v387 = vpack.c.b16 %v369, %v367
    %v388 = vpack.c.b16 %v370, %v368
    %v389 = vpack.c.b16 %v373, %v371
    %v390 = vpack.c.b16 %v374, %v372
    %407 = vmatprep.subr.bf16.mxu0 %v390
    %408 = vmatpush1.bf16.msra.mxu0 %v389
    %409 = vmatprep.subr.bf16.mxu0 %v388
    %410 = vmatpush1.bf16.msra.mxu0 %v387
    %411 = vmatprep.subr.bf16.mxu0 %v386
    %412 = vmatpush1.bf16.msra.mxu0 %v385
    %413 = vmatprep.subr.bf16.mxu0 %v384
    %414 = vmatpush1.bf16.msra.mxu0 %v383
    %415 = vmatprep.subr.bf16.mxu0 %v382
    %416 = vmatpush1.bf16.msra.mxu0 %v381
    %417 = vmatprep.subr.bf16.mxu0 %v380
    %418 = vmatpush1.bf16.msra.mxu0 %v379
    %419 = vmatprep.subr.bf16.mxu0 %v378
    %420 = vmatpush1.bf16.msra.mxu0 %v377
    %421 = vmatprep.subr.bf16.mxu0 %v376
    %422 = vmatpush1.bf16.msra.mxu0 %v375
    %423 = vmatprep.subr.bf16.mxu0 0
    %424 = vmatpush2.bf16.msra.mxu0 0
    %425 = vmatprep.subr.bf16.mxu0 0
    %426 = vmatpush2.bf16.msra.mxu0 0
    %427 = vmatprep.subr.bf16.mxu0 0
    %428 = vmatpush2.bf16.msra.mxu0 0
    %429 = vmatprep.subr.bf16.mxu0 0
    %430 = vmatpush2.bf16.msra.mxu0 0
    %431 = vmatprep.subr.bf16.mxu0 0
    %432 = vmatpush2.bf16.msra.mxu0 0
    %433 = vmatprep.subr.bf16.mxu0 0
    %434 = vmatpush2.bf16.msra.mxu0 0
    %435 = vmatprep.subr.bf16.mxu0 0
    %436 = vmatpush2.bf16.msra.mxu0 0
    %437 = vmatprep.subr.bf16.mxu0 0
    %438 = vmatpush2.bf16.msra.mxu0 0
    %439 = vmatprep.mubr.bf16.mxu0 0
    %440 = vmatmul.mubr.bf16.gmra.mxu0 %v295
    %v441 = vpop.f32.mrf.mxu0
    %v442 = vadd.f32 0.0, %v441
    %v443 = vpop.f32.mrf.mxu0
    %v444 = vadd.f32 0.0, %v443
    %v445 = vpop.f32.mrf.mxu0
    %v446 = vadd.f32 0.0, %v445
    %v447 = vpop.f32.mrf.mxu0
    %v448 = vadd.f32 0.0, %v447
    %449 = vmatprep.mubr.bf16.mxu0 0
    %450 = vmatmul.mubr.bf16.gmra.mxu0 %v296
    %v451 = vpop.f32.mrf.mxu0
    %v452 = vadd.f32 0.0, %v451
    %v453 = vpop.f32.mrf.mxu0
    %v454 = vadd.f32 0.0, %v453
    %v455 = vpop.f32.mrf.mxu0
    %v456 = vadd.f32 0.0, %v455
    %v457 = vpop.f32.mrf.mxu0
    %v458 = vadd.f32 0.0, %v457
    %459 = vmatprep.mubr.bf16.mxu0 0
    %460 = vmatmul.mubr.bf16.gmra.mxu0 %v297
    %v461 = vpop.f32.mrf.mxu0
    %v462 = vadd.f32 0.0, %v461
    %v463 = vpop.f32.mrf.mxu0
    %v464 = vadd.f32 0.0, %v463
    %v465 = vpop.f32.mrf.mxu0
    %v466 = vadd.f32 0.0, %v465
    %v467 = vpop.f32.mrf.mxu0
    %v468 = vadd.f32 0.0, %v467
    %469 = vmatprep.mubr.bf16.mxu0 0
    %470 = vmatmul.mubr.bf16.gmra.mxu0 %v298
    %v471 = vpop.f32.mrf.mxu0
    %v472 = vadd.f32 0.0, %v471
    %v473 = vpop.f32.mrf.mxu0
    %v474 = vadd.f32 0.0, %v473
    %v475 = vpop.f32.mrf.mxu0
    %v476 = vadd.f32 0.0, %v475
    %v477 = vpop.f32.mrf.mxu0
    %v478 = vadd.f32 0.0, %v477
    %479 = vmatprep.mubr.bf16.mxu0 0
    %480 = vmatmul.mubr.bf16.gmra.mxu0 %v299
    %v481 = vpop.f32.mrf.mxu0
    %v482 = vadd.f32 0.0, %v481
    %v483 = vpop.f32.mrf.mxu0
    %v484 = vadd.f32 0.0, %v483
    %v485 = vpop.f32.mrf.mxu0
    %v486 = vadd.f32 0.0, %v485
    %v487 = vpop.f32.mrf.mxu0
    %v488 = vadd.f32 0.0, %v487
    %489 = vmatprep.mubr.bf16.mxu0 0
    %490 = vmatmul.mubr.bf16.gmra.mxu0 %v300
    %v491 = vpop.f32.mrf.mxu0
    %v492 = vadd.f32 0.0, %v491
    %v493 = vpop.f32.mrf.mxu0
    %v494 = vadd.f32 0.0, %v493
    %v495 = vpop.f32.mrf.mxu0
    %v496 = vadd.f32 0.0, %v495
    %v497 = vpop.f32.mrf.mxu0
    %v498 = vadd.f32 0.0, %v497
    %499 = vmatprep.mubr.bf16.mxu0 0
    %500 = vmatmul.mubr.bf16.gmra.mxu0 %v301
    %v501 = vpop.f32.mrf.mxu0
    %v502 = vadd.f32 0.0, %v501
    %v503 = vpop.f32.mrf.mxu0
    %v504 = vadd.f32 0.0, %v503
    %v505 = vpop.f32.mrf.mxu0
    %v506 = vadd.f32 0.0, %v505
    %v507 = vpop.f32.mrf.mxu0
    %v508 = vadd.f32 0.0, %v507
    %509 = vmatprep.mubr.bf16.mxu0 0
    %510 = vmatmul.mubr.bf16.gmra.mxu0 %v302
    %v511 = vpop.f32.mrf.mxu0
    %v512 = vadd.f32 0.0, %v511
    %v513 = vpop.f32.mrf.mxu0
    %v514 = vadd.f32 0.0, %v513
    %v515 = vpop.f32.mrf.mxu0
    %v516 = vadd.f32 0.0, %v515
    %v517 = vpop.f32.mrf.mxu0
    %v518 = vadd.f32 0.0, %v517
    %519 = vmatprep.mubr.bf16.mxu0 0
    %520 = vmatmul.mubr.bf16.gmra.mxu0 %v303
    %v521 = vpop.f32.mrf.mxu0
    %v522 = vadd.f32 0.0, %v521
    %v523 = vpop.f32.mrf.mxu0
    %v524 = vadd.f32 0.0, %v523
    %v525 = vpop.f32.mrf.mxu0
    %v526 = vadd.f32 0.0, %v525
    %v527 = vpop.f32.mrf.mxu0
    %v528 = vadd.f32 0.0, %v527
    %529 = vmatprep.mubr.bf16.mxu0 0
    %530 = vmatmul.mubr.bf16.gmra.mxu0 %v304
    %v531 = vpop.f32.mrf.mxu0
    %v532 = vadd.f32 0.0, %v531
    %v533 = vpop.f32.mrf.mxu0
    %v534 = vadd.f32 0.0, %v533
    %v535 = vpop.f32.mrf.mxu0
    %v536 = vadd.f32 0.0, %v535
    %v537 = vpop.f32.mrf.mxu0
    %v538 = vadd.f32 0.0, %v537
    %539 = vmatprep.mubr.bf16.mxu0 0
    %540 = vmatmul.mubr.bf16.gmra.mxu0 %v305
    %v541 = vpop.f32.mrf.mxu0
    %v542 = vadd.f32 0.0, %v541
    %v543 = vpop.f32.mrf.mxu0
    %v544 = vadd.f32 0.0, %v543
    %v545 = vpop.f32.mrf.mxu0
    %v546 = vadd.f32 0.0, %v545
    %v547 = vpop.f32.mrf.mxu0
    %v548 = vadd.f32 0.0, %v547
    %549 = vmatprep.mubr.bf16.mxu0 0
    %550 = vmatmul.mubr.bf16.gmra.mxu0 %v306
    %v551 = vpop.f32.mrf.mxu0
    %v552 = vadd.f32 0.0, %v551
    %v553 = vpop.f32.mrf.mxu0
    %v554 = vadd.f32 0.0, %v553
    %v555 = vpop.f32.mrf.mxu0
    %v556 = vadd.f32 0.0, %v555
    %v557 = vpop.f32.mrf.mxu0
    %v558 = vadd.f32 0.0, %v557
    %559 = vmatprep.mubr.bf16.mxu0 0
    %560 = vmatmul.mubr.bf16.gmra.mxu0 %v307
    %v561 = vpop.f32.mrf.mxu0
    %v562 = vadd.f32 0.0, %v561
    %v563 = vpop.f32.mrf.mxu0
    %v564 = vadd.f32 0.0, %v563
    %v565 = vpop.f32.mrf.mxu0
    %v566 = vadd.f32 0.0, %v565
    %v567 = vpop.f32.mrf.mxu0
    %v568 = vadd.f32 0.0, %v567
    %569 = vmatprep.mubr.bf16.mxu0 0
    %570 = vmatmul.mubr.bf16.gmra.mxu0 %v308
    %v571 = vpop.f32.mrf.mxu0
    %v572 = vadd.f32 0.0, %v571
    %v573 = vpop.f32.mrf.mxu0
    %v574 = vadd.f32 0.0, %v573
    %v575 = vpop.f32.mrf.mxu0
    %v576 = vadd.f32 0.0, %v575
    %v577 = vpop.f32.mrf.mxu0
    %v578 = vadd.f32 0.0, %v577
    %579 = vmatprep.mubr.bf16.mxu0 0
    %580 = vmatmul.mubr.bf16.gmra.mxu0 %v309
    %v581 = vpop.f32.mrf.mxu0
    %v582 = vadd.f32 0.0, %v581
    %v583 = vpop.f32.mrf.mxu0
    %v584 = vadd.f32 0.0, %v583
    %v585 = vpop.f32.mrf.mxu0
    %v586 = vadd.f32 0.0, %v585
    %v587 = vpop.f32.mrf.mxu0
    %v588 = vadd.f32 0.0, %v587
    %589 = vmatprep.mubr.bf16.mxu0 0
    %590 = vmatmul.mubr.bf16.gmra.mxu0 %v310
    %v591 = vpop.f32.mrf.mxu0
    %v592 = vadd.f32 0.0, %v591
    %v593 = vpop.f32.mrf.mxu0
    %v594 = vadd.f32 0.0, %v593
    %v595 = vpop.f32.mrf.mxu0
    %v596 = vadd.f32 0.0, %v595
    %v597 = vpop.f32.mrf.mxu0
    %v598 = vadd.f32 0.0, %v597
    %599 = vdwg.mxu0
    %v600 = vld [vmem:[%s3] sm:$0x1]
    %v601 = vld [vmem:[%s1] sm:$0xf]
    %v602 = vld [vmem:[%s1 + $0x4] sm:$0xf]
    %v603 = vunpack.c.l.bf16 %v601
    %v604 = vunpack.c.l.bf16 %v602
    %vm637 = vcmask 1046528
    %v638 = vrot.slane %v442, 1
    %v639 = vrot.slane %v446, 1
    %v640 = vsel %vm637, %v638, %v639
    %v641 = vrot.slane %v452, 1
    %v642 = vrot.slane %v456, 1
    %v643 = vsel %vm637, %v641, %v642
    %v644 = vrot.slane %v462, 1
    %v645 = vrot.slane %v466, 1
    %v646 = vsel %vm637, %v644, %v645
    %v647 = vrot.slane %v472, 1
    %v648 = vrot.slane %v476, 1
    %v649 = vsel %vm637, %v647, %v648
    %v650 = vrot.slane %v482, 1
    %v651 = vrot.slane %v486, 1
    %v652 = vsel %vm637, %v650, %v651
    %v653 = vrot.slane %v492, 1
    %v654 = vrot.slane %v496, 1
    %v655 = vsel %vm637, %v653, %v654
    %v656 = vrot.slane %v502, 1
    %v657 = vrot.slane %v506, 1
    %v658 = vsel %vm637, %v656, %v657
    %v659 = vrot.slane %v512, 1
    %v660 = vrot.slane %v516, 1
    %v661 = vsel %vm637, %v659, %v660
    %v662 = vrot.slane %v522, 1
    %v663 = vrot.slane %v526, 1
    %v664 = vsel %vm637, %v662, %v663
    %v665 = vrot.slane %v532, 1
    %v666 = vrot.slane %v536, 1
    %v667 = vsel %vm637, %v665, %v666
    %v668 = vrot.slane %v542, 1
    %v669 = vrot.slane %v546, 1
    %v670 = vsel %vm637, %v668, %v669
    %v671 = vrot.slane %v552, 1
    %v672 = vrot.slane %v556, 1
    %v673 = vsel %vm637, %v671, %v672
    %v674 = vrot.slane %v562, 1
    %v675 = vrot.slane %v566, 1
    %v676 = vsel %vm637, %v674, %v675
    %v677 = vrot.slane %v572, 1
    %v678 = vrot.slane %v576, 1
    %v679 = vsel %vm637, %v677, %v678
    %v680 = vrot.slane %v582, 1
    %v681 = vrot.slane %v586, 1
    %v682 = vsel %vm637, %v680, %v681
    %v683 = vrot.slane %v592, 1
    %v684 = vrot.slane %v596, 1
    %v685 = vsel %vm637, %v683, %v684
    %686 = vrot.lane.b32.xlu0 %v640, 96
    %v687 = vpop.permute.xlu0 %686
    %688 = vrot.lane.b32.xlu0 %v639, 96
    %v689 = vpop.permute.xlu0 %688
    %690 = vrot.lane.b32.xlu0 %v643, 96
    %v691 = vpop.permute.xlu0 %690
    %692 = vrot.lane.b32.xlu0 %v642, 96
    %v693 = vpop.permute.xlu0 %692
    %694 = vrot.lane.b32.xlu0 %v646, 96
    %v695 = vpop.permute.xlu0 %694
    %696 = vrot.lane.b32.xlu0 %v645, 96
    %v697 = vpop.permute.xlu0 %696
    %698 = vrot.lane.b32.xlu0 %v649, 96
    %v699 = vpop.permute.xlu0 %698
    %700 = vrot.lane.b32.xlu0 %v648, 96
    %v701 = vpop.permute.xlu0 %700
    %702 = vrot.lane.b32.xlu0 %v652, 96
    %v703 = vpop.permute.xlu0 %702
    %704 = vrot.lane.b32.xlu0 %v651, 96
    %v705 = vpop.permute.xlu0 %704
    %706 = vrot.lane.b32.xlu0 %v655, 96
    %v707 = vpop.permute.xlu0 %706
    %708 = vrot.lane.b32.xlu0 %v654, 96
    %v709 = vpop.permute.xlu0 %708
    %710 = vrot.lane.b32.xlu0 %v658, 96
    %v711 = vpop.permute.xlu0 %710
    %712 = vrot.lane.b32.xlu0 %v657, 96
    %v713 = vpop.permute.xlu0 %712
    %714 = vrot.lane.b32.xlu0 %v661, 96
    %v715 = vpop.permute.xlu0 %714
    %716 = vrot.lane.b32.xlu0 %v660, 96
    %v717 = vpop.permute.xlu0 %716
    %718 = vrot.lane.b32.xlu0 %v664, 96
    %v719 = vpop.permute.xlu0 %718
    %720 = vrot.lane.b32.xlu0 %v663, 96
    %v721 = vpop.permute.xlu0 %720
    %722 = vrot.lane.b32.xlu0 %v667, 96
    %v723 = vpop.permute.xlu0 %722
    %724 = vrot.lane.b32.xlu0 %v666, 96
    %v725 = vpop.permute.xlu0 %724
    %726 = vrot.lane.b32.xlu0 %v670, 96
    %v727 = vpop.permute.xlu0 %726
    %728 = vrot.lane.b32.xlu0 %v669, 96
    %v729 = vpop.permute.xlu0 %728
    %730 = vrot.lane.b32.xlu0 %v673, 96
    %v731 = vpop.permute.xlu0 %730
    %732 = vrot.lane.b32.xlu0 %v672, 96
    %v733 = vpop.permute.xlu0 %732
    %734 = vrot.lane.b32.xlu0 %v676, 96
    %v735 = vpop.permute.xlu0 %734
    %736 = vrot.lane.b32.xlu0 %v675, 96
    %v737 = vpop.permute.xlu0 %736
    %738 = vrot.lane.b32.xlu0 %v679, 96
    %v739 = vpop.permute.xlu0 %738
    %740 = vrot.lane.b32.xlu0 %v678, 96
    %v741 = vpop.permute.xlu0 %740
    %742 = vrot.lane.b32.xlu0 %v682, 96
    %v743 = vpop.permute.xlu0 %742
    %744 = vrot.lane.b32.xlu0 %v681, 96
    %v745 = vpop.permute.xlu0 %744
    %746 = vrot.lane.b32.xlu0 %v685, 96
    %v747 = vpop.permute.xlu0 %746
    %748 = vrot.lane.b32.xlu0 %v684, 96
    %v749 = vpop.permute.xlu0 %748
    %v782 = vadd.f32 %v442, %v687
    %v783 = vadd.f32 %v446, %v689
    %v784 = vadd.f32 %v452, %v691
    %v785 = vadd.f32 %v456, %v693
    %v786 = vadd.f32 %v462, %v695
    %v787 = vadd.f32 %v466, %v697
    %v788 = vadd.f32 %v472, %v699
    %v789 = vadd.f32 %v476, %v701
    %v790 = vadd.f32 %v482, %v703
    %v791 = vadd.f32 %v486, %v705
    %v792 = vadd.f32 %v492, %v707
    %v793 = vadd.f32 %v496, %v709
    %v794 = vadd.f32 %v502, %v711
    %v795 = vadd.f32 %v506, %v713
    %v796 = vadd.f32 %v512, %v715
    %v797 = vadd.f32 %v516, %v717
    %v798 = vadd.f32 %v522, %v719
    %v799 = vadd.f32 %v526, %v721
    %v800 = vadd.f32 %v532, %v723
    %v801 = vadd.f32 %v536, %v725
    %v802 = vadd.f32 %v542, %v727
    %v803 = vadd.f32 %v546, %v729
    %v804 = vadd.f32 %v552, %v731
    %v805 = vadd.f32 %v556, %v733
    %v806 = vadd.f32 %v562, %v735
    %v807 = vadd.f32 %v566, %v737
    %v808 = vadd.f32 %v572, %v739
    %v809 = vadd.f32 %v576, %v741
    %v810 = vadd.f32 %v582, %v743
    %v811 = vadd.f32 %v586, %v745
    %v812 = vadd.f32 %v592, %v747
    %v813 = vadd.f32 %v596, %v749
    %v815 = vlaneseq
    %v816 = vshrl.u32 %v815, 7
    %v817 = vsub.s32 0, %v816
    %v818 = vrot.slane %v600, %v817
    %v820 = vadd.f32 %v782, %v818
    %v821 = vadd.f32 %v783, %v818
    %v822 = vadd.f32 %v784, %v818
    %v823 = vadd.f32 %v785, %v818
    %v824 = vadd.f32 %v786, %v818
    %v825 = vadd.f32 %v787, %v818
    %v826 = vadd.f32 %v788, %v818
    %v827 = vadd.f32 %v789, %v818
    %v828 = vadd.f32 %v790, %v818
    %v829 = vadd.f32 %v791, %v818
    %v830 = vadd.f32 %v792, %v818
    %v831 = vadd.f32 %v793, %v818
    %v832 = vadd.f32 %v794, %v818
    %v833 = vadd.f32 %v795, %v818
    %v834 = vadd.f32 %v796, %v818
    %v835 = vadd.f32 %v797, %v818
    %v836 = vadd.f32 %v798, %v818
    %v837 = vadd.f32 %v799, %v818
    %v838 = vadd.f32 %v800, %v818
    %v839 = vadd.f32 %v801, %v818
    %v840 = vadd.f32 %v802, %v818
    %v841 = vadd.f32 %v803, %v818
    %v842 = vadd.f32 %v804, %v818
    %v843 = vadd.f32 %v805, %v818
    %v844 = vadd.f32 %v806, %v818
    %v845 = vadd.f32 %v807, %v818
    %v846 = vadd.f32 %v808, %v818
    %v847 = vadd.f32 %v809, %v818
    %v848 = vadd.f32 %v810, %v818
    %v849 = vadd.f32 %v811, %v818
    %v850 = vadd.f32 %v812, %v818
    %v851 = vadd.f32 %v813, %v818
    %v852 = vmax.f32 %v820, 0.0
    %v853 = vmax.f32 %v821, 0.0
    %v854 = vmax.f32 %v822, 0.0
    %v855 = vmax.f32 %v823, 0.0
    %v856 = vmax.f32 %v824, 0.0
    %v857 = vmax.f32 %v825, 0.0
    %v858 = vmax.f32 %v826, 0.0
    %v859 = vmax.f32 %v827, 0.0
    %v860 = vmax.f32 %v828, 0.0
    %v861 = vmax.f32 %v829, 0.0
    %v862 = vmax.f32 %v830, 0.0
    %v863 = vmax.f32 %v831, 0.0
    %v864 = vmax.f32 %v832, 0.0
    %v865 = vmax.f32 %v833, 0.0
    %v866 = vmax.f32 %v834, 0.0
    %v867 = vmax.f32 %v835, 0.0
    %v868 = vmax.f32 %v836, 0.0
    %v869 = vmax.f32 %v837, 0.0
    %v870 = vmax.f32 %v838, 0.0
    %v871 = vmax.f32 %v839, 0.0
    %v872 = vmax.f32 %v840, 0.0
    %v873 = vmax.f32 %v841, 0.0
    %v874 = vmax.f32 %v842, 0.0
    %v875 = vmax.f32 %v843, 0.0
    %v876 = vmax.f32 %v844, 0.0
    %v877 = vmax.f32 %v845, 0.0
    %v878 = vmax.f32 %v846, 0.0
    %v879 = vmax.f32 %v847, 0.0
    %v880 = vmax.f32 %v848, 0.0
    %v881 = vmax.f32 %v849, 0.0
    %v882 = vmax.f32 %v850, 0.0
    %v883 = vmax.f32 %v851, 0.0
    %vm884 = vcmask 261120
    %v885 = vsel %vm884, %v852, -inf
    %vm886 = vcmask 260096
    %v887 = vsel %vm886, %v853, -inf
    %v888 = vmax.f32 %v885, %v887
    %v889 = vrot.slane %v888, 4
    %v890 = vmax.f32 %v888, %v889
    %v891 = vrot.slane %v890, 2
    %v892 = vmax.f32 %v890, %v891
    %v893 = vrot.slane %v892, 1
    %v894 = vmax.f32 %v892, %v893
    %v895 = vsel %vm884, %v854, -inf
    %v896 = vsel %vm886, %v855, -inf
    %v897 = vmax.f32 %v895, %v896
    %v898 = vrot.slane %v897, 4
    %v899 = vmax.f32 %v897, %v898
    %v900 = vrot.slane %v899, 2
    %v901 = vmax.f32 %v899, %v900
    %v902 = vrot.slane %v901, 1
    %v903 = vmax.f32 %v901, %v902
    %v904 = vsel %vm884, %v856, -inf
    %v905 = vsel %vm886, %v857, -inf
    %v906 = vmax.f32 %v904, %v905
    %v907 = vrot.slane %v906, 4
    %v908 = vmax.f32 %v906, %v907
    %v909 = vrot.slane %v908, 2
    %v910 = vmax.f32 %v908, %v909
    %v911 = vrot.slane %v910, 1
    %v912 = vmax.f32 %v910, %v911
    %v913 = vsel %vm884, %v858, -inf
    %v914 = vsel %vm886, %v859, -inf
    %v915 = vmax.f32 %v913, %v914
    %v916 = vrot.slane %v915, 4
    %v917 = vmax.f32 %v915, %v916
    %v918 = vrot.slane %v917, 2
    %v919 = vmax.f32 %v917, %v918
    %v920 = vrot.slane %v919, 1
    %v921 = vmax.f32 %v919, %v920
    %v922 = vsel %vm884, %v860, -inf
    %v923 = vsel %vm886, %v861, -inf
    %v924 = vmax.f32 %v922, %v923
    %v925 = vrot.slane %v924, 4
    %v926 = vmax.f32 %v924, %v925
    %v927 = vrot.slane %v926, 2
    %v928 = vmax.f32 %v926, %v927
    %v929 = vrot.slane %v928, 1
    %v930 = vmax.f32 %v928, %v929
    %v931 = vsel %vm884, %v862, -inf
    %v932 = vsel %vm886, %v863, -inf
    %v933 = vmax.f32 %v931, %v932
    %v934 = vrot.slane %v933, 4
    %v935 = vmax.f32 %v933, %v934
    %v936 = vrot.slane %v935, 2
    %v937 = vmax.f32 %v935, %v936
    %v938 = vrot.slane %v937, 1
    %v939 = vmax.f32 %v937, %v938
    %v940 = vsel %vm884, %v864, -inf
    %v941 = vsel %vm886, %v865, -inf
    %v942 = vmax.f32 %v940, %v941
    %v943 = vrot.slane %v942, 4
    %v944 = vmax.f32 %v942, %v943
    %v945 = vrot.slane %v944, 2
    %v946 = vmax.f32 %v944, %v945
    %v947 = vrot.slane %v946, 1
    %v948 = vmax.f32 %v946, %v947
    %v949 = vsel %vm884, %v866, -inf
    %v950 = vsel %vm886, %v867, -inf
    %v951 = vmax.f32 %v949, %v950
    %v952 = vrot.slane %v951, 4
    %v953 = vmax.f32 %v951, %v952
    %v954 = vrot.slane %v953, 2
    %v955 = vmax.f32 %v953, %v954
    %v956 = vrot.slane %v955, 1
    %v957 = vmax.f32 %v955, %v956
    %v958 = vsel %vm884, %v868, -inf
    %v959 = vsel %vm886, %v869, -inf
    %v960 = vmax.f32 %v958, %v959
    %v961 = vrot.slane %v960, 4
    %v962 = vmax.f32 %v960, %v961
    %v963 = vrot.slane %v962, 2
    %v964 = vmax.f32 %v962, %v963
    %v965 = vrot.slane %v964, 1
    %v966 = vmax.f32 %v964, %v965
    %v967 = vsel %vm884, %v870, -inf
    %v968 = vsel %vm886, %v871, -inf
    %v969 = vmax.f32 %v967, %v968
    %v970 = vrot.slane %v969, 4
    %v971 = vmax.f32 %v969, %v970
    %v972 = vrot.slane %v971, 2
    %v973 = vmax.f32 %v971, %v972
    %v974 = vrot.slane %v973, 1
    %v975 = vmax.f32 %v973, %v974
    %v976 = vsel %vm884, %v872, -inf
    %v977 = vsel %vm886, %v873, -inf
    %v978 = vmax.f32 %v976, %v977
    %v979 = vrot.slane %v978, 4
    %v980 = vmax.f32 %v978, %v979
    %v981 = vrot.slane %v980, 2
    %v982 = vmax.f32 %v980, %v981
    %v983 = vrot.slane %v982, 1
    %v984 = vmax.f32 %v982, %v983
    %v985 = vsel %vm884, %v874, -inf
    %v986 = vsel %vm886, %v875, -inf
    %v987 = vmax.f32 %v985, %v986
    %v988 = vrot.slane %v987, 4
    %v989 = vmax.f32 %v987, %v988
    %v990 = vrot.slane %v989, 2
    %v991 = vmax.f32 %v989, %v990
    %v992 = vrot.slane %v991, 1
    %v993 = vmax.f32 %v991, %v992
    %v994 = vsel %vm884, %v876, -inf
    %v995 = vsel %vm886, %v877, -inf
    %v996 = vmax.f32 %v994, %v995
    %v997 = vrot.slane %v996, 4
    %v998 = vmax.f32 %v996, %v997
    %v999 = vrot.slane %v998, 2
    %v1000 = vmax.f32 %v998, %v999
    %v1001 = vrot.slane %v1000, 1
    %v1002 = vmax.f32 %v1000, %v1001
    %v1003 = vsel %vm884, %v878, -inf
    %v1004 = vsel %vm886, %v879, -inf
    %v1005 = vmax.f32 %v1003, %v1004
    %v1006 = vrot.slane %v1005, 4
    %v1007 = vmax.f32 %v1005, %v1006
    %v1008 = vrot.slane %v1007, 2
    %v1009 = vmax.f32 %v1007, %v1008
    %v1010 = vrot.slane %v1009, 1
    %v1011 = vmax.f32 %v1009, %v1010
    %v1012 = vsel %vm884, %v880, -inf
    %v1013 = vsel %vm886, %v881, -inf
    %v1014 = vmax.f32 %v1012, %v1013
    %v1015 = vrot.slane %v1014, 4
    %v1016 = vmax.f32 %v1014, %v1015
    %v1017 = vrot.slane %v1016, 2
    %v1018 = vmax.f32 %v1016, %v1017
    %v1019 = vrot.slane %v1018, 1
    %v1020 = vmax.f32 %v1018, %v1019
    %v1021 = vsel %vm884, %v882, -inf
    %v1022 = vsel %vm886, %v883, -inf
    %v1023 = vmax.f32 %v1021, %v1022
    %v1024 = vrot.slane %v1023, 4
    %v1025 = vmax.f32 %v1023, %v1024
    %v1026 = vrot.slane %v1025, 2
    %v1027 = vmax.f32 %v1025, %v1026
    %v1028 = vrot.slane %v1027, 1
    %v1029 = vmax.f32 %v1027, %v1028
    %vm1062 = vcmask 1045504
    %v1063 = vrot.slane %v444, 2
    %v1064 = vrot.slane %v448, 2
    %v1065 = vsel %vm1062, %v1063, %v1064
    %v1066 = vrot.slane %v454, 2
    %v1067 = vrot.slane %v458, 2
    %v1068 = vsel %vm1062, %v1066, %v1067
    %v1069 = vrot.slane %v464, 2
    %v1070 = vrot.slane %v468, 2
    %v1071 = vsel %vm1062, %v1069, %v1070
    %v1072 = vrot.slane %v474, 2
    %v1073 = vrot.slane %v478, 2
    %v1074 = vsel %vm1062, %v1072, %v1073
    %v1075 = vrot.slane %v484, 2
    %v1076 = vrot.slane %v488, 2
    %v1077 = vsel %vm1062, %v1075, %v1076
    %v1078 = vrot.slane %v494, 2
    %v1079 = vrot.slane %v498, 2
    %v1080 = vsel %vm1062, %v1078, %v1079
    %v1081 = vrot.slane %v504, 2
    %v1082 = vrot.slane %v508, 2
    %v1083 = vsel %vm1062, %v1081, %v1082
    %v1084 = vrot.slane %v514, 2
    %v1085 = vrot.slane %v518, 2
    %v1086 = vsel %vm1062, %v1084, %v1085
    %v1087 = vrot.slane %v524, 2
    %v1088 = vrot.slane %v528, 2
    %v1089 = vsel %vm1062, %v1087, %v1088
    %v1090 = vrot.slane %v534, 2
    %v1091 = vrot.slane %v538, 2
    %v1092 = vsel %vm1062, %v1090, %v1091
    %v1093 = vrot.slane %v544, 2
    %v1094 = vrot.slane %v548, 2
    %v1095 = vsel %vm1062, %v1093, %v1094
    %v1096 = vrot.slane %v554, 2
    %v1097 = vrot.slane %v558, 2
    %v1098 = vsel %vm1062, %v1096, %v1097
    %v1099 = vrot.slane %v564, 2
    %v1100 = vrot.slane %v568, 2
    %v1101 = vsel %vm1062, %v1099, %v1100
    %v1102 = vrot.slane %v574, 2
    %v1103 = vrot.slane %v578, 2
    %v1104 = vsel %vm1062, %v1102, %v1103
    %v1105 = vrot.slane %v584, 2
    %v1106 = vrot.slane %v588, 2
    %v1107 = vsel %vm1062, %v1105, %v1106
    %v1108 = vrot.slane %v594, 2
    %v1109 = vrot.slane %v598, 2
    %v1110 = vsel %vm1062, %v1108, %v1109
    %1111 = vrot.lane.b32.xlu0 %v1065, 64
    %v1112 = vpop.permute.xlu0 %1111
    %1113 = vrot.lane.b32.xlu0 %v1064, 64
    %v1114 = vpop.permute.xlu0 %1113
    %1115 = vrot.lane.b32.xlu0 %v1068, 64
    %v1116 = vpop.permute.xlu0 %1115
    %1117 = vrot.lane.b32.xlu0 %v1067, 64
    %v1118 = vpop.permute.xlu0 %1117
    %1119 = vrot.lane.b32.xlu0 %v1071, 64
    %v1120 = vpop.permute.xlu0 %1119
    %1121 = vrot.lane.b32.xlu0 %v1070, 64
    %v1122 = vpop.permute.xlu0 %1121
    %1123 = vrot.lane.b32.xlu0 %v1074, 64
    %v1124 = vpop.permute.xlu0 %1123
    %1125 = vrot.lane.b32.xlu0 %v1073, 64
    %v1126 = vpop.permute.xlu0 %1125
    %1127 = vrot.lane.b32.xlu0 %v1077, 64
    %v1128 = vpop.permute.xlu0 %1127
    %1129 = vrot.lane.b32.xlu0 %v1076, 64
    %v1130 = vpop.permute.xlu0 %1129
    %1131 = vrot.lane.b32.xlu0 %v1080, 64
    %v1132 = vpop.permute.xlu0 %1131
    %1133 = vrot.lane.b32.xlu0 %v1079, 64
    %v1134 = vpop.permute.xlu0 %1133
    %1135 = vrot.lane.b32.xlu0 %v1083, 64
    %v1136 = vpop.permute.xlu0 %1135
    %1137 = vrot.lane.b32.xlu0 %v1082, 64
    %v1138 = vpop.permute.xlu0 %1137
    %1139 = vrot.lane.b32.xlu0 %v1086, 64
    %v1140 = vpop.permute.xlu0 %1139
    %1141 = vrot.lane.b32.xlu0 %v1085, 64
    %v1142 = vpop.permute.xlu0 %1141
    %1143 = vrot.lane.b32.xlu0 %v1089, 64
    %v1144 = vpop.permute.xlu0 %1143
    %1145 = vrot.lane.b32.xlu0 %v1088, 64
    %v1146 = vpop.permute.xlu0 %1145
    %1147 = vrot.lane.b32.xlu0 %v1092, 64
    %v1148 = vpop.permute.xlu0 %1147
    %1149 = vrot.lane.b32.xlu0 %v1091, 64
    %v1150 = vpop.permute.xlu0 %1149
    %1151 = vrot.lane.b32.xlu0 %v1095, 64
    %v1152 = vpop.permute.xlu0 %1151
    %1153 = vrot.lane.b32.xlu0 %v1094, 64
    %v1154 = vpop.permute.xlu0 %1153
    %1155 = vrot.lane.b32.xlu0 %v1098, 64
    %v1156 = vpop.permute.xlu0 %1155
    %1157 = vrot.lane.b32.xlu0 %v1097, 64
    %v1158 = vpop.permute.xlu0 %1157
    %1159 = vrot.lane.b32.xlu0 %v1101, 64
    %v1160 = vpop.permute.xlu0 %1159
    %1161 = vrot.lane.b32.xlu0 %v1100, 64
    %v1162 = vpop.permute.xlu0 %1161
    %1163 = vrot.lane.b32.xlu0 %v1104, 64
    %v1164 = vpop.permute.xlu0 %1163
    %1165 = vrot.lane.b32.xlu0 %v1103, 64
    %v1166 = vpop.permute.xlu0 %1165
    %1167 = vrot.lane.b32.xlu0 %v1107, 64
    %v1168 = vpop.permute.xlu0 %1167
    %1169 = vrot.lane.b32.xlu0 %v1106, 64
    %v1170 = vpop.permute.xlu0 %1169
    %1171 = vrot.lane.b32.xlu0 %v1110, 64
    %v1172 = vpop.permute.xlu0 %1171
    %1173 = vrot.lane.b32.xlu0 %v1109, 64
    %v1174 = vpop.permute.xlu0 %1173
    %v1207 = vadd.f32 %v782, %v1112
    %v1208 = vadd.f32 %v783, %v1114
    %v1209 = vadd.f32 %v784, %v1116
    %v1210 = vadd.f32 %v785, %v1118
    %v1211 = vadd.f32 %v786, %v1120
    %v1212 = vadd.f32 %v787, %v1122
    %v1213 = vadd.f32 %v788, %v1124
    %v1214 = vadd.f32 %v789, %v1126
    %v1215 = vadd.f32 %v790, %v1128
    %v1216 = vadd.f32 %v791, %v1130
    %v1217 = vadd.f32 %v792, %v1132
    %v1218 = vadd.f32 %v793, %v1134
    %v1219 = vadd.f32 %v794, %v1136
    %v1220 = vadd.f32 %v795, %v1138
    %v1221 = vadd.f32 %v796, %v1140
    %v1222 = vadd.f32 %v797, %v1142
    %v1223 = vadd.f32 %v798, %v1144
    %v1224 = vadd.f32 %v799, %v1146
    %v1225 = vadd.f32 %v800, %v1148
    %v1226 = vadd.f32 %v801, %v1150
    %v1227 = vadd.f32 %v802, %v1152
    %v1228 = vadd.f32 %v803, %v1154
    %v1229 = vadd.f32 %v804, %v1156
    %v1230 = vadd.f32 %v805, %v1158
    %v1231 = vadd.f32 %v806, %v1160
    %v1232 = vadd.f32 %v807, %v1162
    %v1233 = vadd.f32 %v808, %v1164
    %v1234 = vadd.f32 %v809, %v1166
    %v1235 = vadd.f32 %v810, %v1168
    %v1236 = vadd.f32 %v811, %v1170
    %v1237 = vadd.f32 %v812, %v1172
    %v1238 = vadd.f32 %v813, %v1174
    %1239 = vrot.lane.b32.xlu0 %v818, 32
    %v1240 = vpop.permute.xlu0 %1239
    %v1242 = vadd.f32 %v1207, %v1240
    %v1243 = vadd.f32 %v1208, %v1240
    %v1244 = vadd.f32 %v1209, %v1240
    %v1245 = vadd.f32 %v1210, %v1240
    %v1246 = vadd.f32 %v1211, %v1240
    %v1247 = vadd.f32 %v1212, %v1240
    %v1248 = vadd.f32 %v1213, %v1240
    %v1249 = vadd.f32 %v1214, %v1240
    %v1250 = vadd.f32 %v1215, %v1240
    %v1251 = vadd.f32 %v1216, %v1240
    %v1252 = vadd.f32 %v1217, %v1240
    %v1253 = vadd.f32 %v1218, %v1240
    %v1254 = vadd.f32 %v1219, %v1240
    %v1255 = vadd.f32 %v1220, %v1240
    %v1256 = vadd.f32 %v1221, %v1240
    %v1257 = vadd.f32 %v1222, %v1240
    %v1258 = vadd.f32 %v1223, %v1240
    %v1259 = vadd.f32 %v1224, %v1240
    %v1260 = vadd.f32 %v1225, %v1240
    %v1261 = vadd.f32 %v1226, %v1240
    %v1262 = vadd.f32 %v1227, %v1240
    %v1263 = vadd.f32 %v1228, %v1240
    %v1264 = vadd.f32 %v1229, %v1240
    %v1265 = vadd.f32 %v1230, %v1240
    %v1266 = vadd.f32 %v1231, %v1240
    %v1267 = vadd.f32 %v1232, %v1240
    %v1268 = vadd.f32 %v1233, %v1240
    %v1269 = vadd.f32 %v1234, %v1240
    %v1270 = vadd.f32 %v1235, %v1240
    %v1271 = vadd.f32 %v1236, %v1240
    %v1272 = vadd.f32 %v1237, %v1240
    %v1273 = vadd.f32 %v1238, %v1240
    %v1274 = vmax.f32 %v1242, 0.0
    %v1275 = vmax.f32 %v1243, 0.0
    %v1276 = vmax.f32 %v1244, 0.0
    %v1277 = vmax.f32 %v1245, 0.0
    %v1278 = vmax.f32 %v1246, 0.0
    %v1279 = vmax.f32 %v1247, 0.0
    %v1280 = vmax.f32 %v1248, 0.0
    %v1281 = vmax.f32 %v1249, 0.0
    %v1282 = vmax.f32 %v1250, 0.0
    %v1283 = vmax.f32 %v1251, 0.0
    %v1284 = vmax.f32 %v1252, 0.0
    %v1285 = vmax.f32 %v1253, 0.0
    %v1286 = vmax.f32 %v1254, 0.0
    %v1287 = vmax.f32 %v1255, 0.0
    %v1288 = vmax.f32 %v1256, 0.0
    %v1289 = vmax.f32 %v1257, 0.0
    %v1290 = vmax.f32 %v1258, 0.0
    %v1291 = vmax.f32 %v1259, 0.0
    %v1292 = vmax.f32 %v1260, 0.0
    %v1293 = vmax.f32 %v1261, 0.0
    %v1294 = vmax.f32 %v1262, 0.0
    %v1295 = vmax.f32 %v1263, 0.0
    %v1296 = vmax.f32 %v1264, 0.0
    %v1297 = vmax.f32 %v1265, 0.0
    %v1298 = vmax.f32 %v1266, 0.0
    %v1299 = vmax.f32 %v1267, 0.0
    %v1300 = vmax.f32 %v1268, 0.0
    %v1301 = vmax.f32 %v1269, 0.0
    %v1302 = vmax.f32 %v1270, 0.0
    %v1303 = vmax.f32 %v1271, 0.0
    %v1304 = vmax.f32 %v1272, 0.0
    %v1305 = vmax.f32 %v1273, 0.0
    %vm1306 = vcmask 785920
    %v1307 = vsel %vm1306, %v1274, -inf
    %vm1308 = vcmask 783872
    %v1309 = vsel %vm1308, %v1275, -inf
    %v1310 = vmax.f32 %v1307, %v1309
    %v1311 = vrot.slane %v1310, 4
    %v1312 = vmax.f32 %v1310, %v1311
    %v1313 = vrot.slane %v1312, 2
    %v1314 = vmax.f32 %v1312, %v1313
    %v1315 = vrot.slane %v1314, 1
    %v1316 = vmax.f32 %v1314, %v1315
    %v1317 = vsel %vm1306, %v1276, -inf
    %v1318 = vsel %vm1308, %v1277, -inf
    %v1319 = vmax.f32 %v1317, %v1318
    %v1320 = vrot.slane %v1319, 4
    %v1321 = vmax.f32 %v1319, %v1320
    %v1322 = vrot.slane %v1321, 2
    %v1323 = vmax.f32 %v1321, %v1322
    %v1324 = vrot.slane %v1323, 1
    %v1325 = vmax.f32 %v1323, %v1324
    %v1326 = vsel %vm1306, %v1278, -inf
    %v1327 = vsel %vm1308, %v1279, -inf
    %v1328 = vmax.f32 %v1326, %v1327
    %v1329 = vrot.slane %v1328, 4
    %v1330 = vmax.f32 %v1328, %v1329
    %v1331 = vrot.slane %v1330, 2
    %v1332 = vmax.f32 %v1330, %v1331
    %v1333 = vrot.slane %v1332, 1
    %v1334 = vmax.f32 %v1332, %v1333
    %v1335 = vsel %vm1306, %v1280, -inf
    %v1336 = vsel %vm1308, %v1281, -inf
    %v1337 = vmax.f32 %v1335, %v1336
    %v1338 = vrot.slane %v1337, 4
    %v1339 = vmax.f32 %v1337, %v1338
    %v1340 = vrot.slane %v1339, 2
    %v1341 = vmax.f32 %v1339, %v1340
    %v1342 = vrot.slane %v1341, 1
    %v1343 = vmax.f32 %v1341, %v1342
    %v1344 = vsel %vm1306, %v1282, -inf
    %v1345 = vsel %vm1308, %v1283, -inf
    %v1346 = vmax.f32 %v1344, %v1345
    %v1347 = vrot.slane %v1346, 4
    %v1348 = vmax.f32 %v1346, %v1347
    %v1349 = vrot.slane %v1348, 2
    %v1350 = vmax.f32 %v1348, %v1349
    %v1351 = vrot.slane %v1350, 1
    %v1352 = vmax.f32 %v1350, %v1351
    %v1353 = vsel %vm1306, %v1284, -inf
    %v1354 = vsel %vm1308, %v1285, -inf
    %v1355 = vmax.f32 %v1353, %v1354
    %v1356 = vrot.slane %v1355, 4
    %v1357 = vmax.f32 %v1355, %v1356
    %v1358 = vrot.slane %v1357, 2
    %v1359 = vmax.f32 %v1357, %v1358
    %v1360 = vrot.slane %v1359, 1
    %v1361 = vmax.f32 %v1359, %v1360
    %v1362 = vsel %vm1306, %v1286, -inf
    %v1363 = vsel %vm1308, %v1287, -inf
    %v1364 = vmax.f32 %v1362, %v1363
    %v1365 = vrot.slane %v1364, 4
    %v1366 = vmax.f32 %v1364, %v1365
    %v1367 = vrot.slane %v1366, 2
    %v1368 = vmax.f32 %v1366, %v1367
    %v1369 = vrot.slane %v1368, 1
    %v1370 = vmax.f32 %v1368, %v1369
    %v1371 = vsel %vm1306, %v1288, -inf
    %v1372 = vsel %vm1308, %v1289, -inf
    %v1373 = vmax.f32 %v1371, %v1372
    %v1374 = vrot.slane %v1373, 4
    %v1375 = vmax.f32 %v1373, %v1374
    %v1376 = vrot.slane %v1375, 2
    %v1377 = vmax.f32 %v1375, %v1376
    %v1378 = vrot.slane %v1377, 1
    %v1379 = vmax.f32 %v1377, %v1378
    %v1380 = vsel %vm1306, %v1290, -inf
    %v1381 = vsel %vm1308, %v1291, -inf
    %v1382 = vmax.f32 %v1380, %v1381
    %v1383 = vrot.slane %v1382, 4
    %v1384 = vmax.f32 %v1382, %v1383
    %v1385 = vrot.slane %v1384, 2
    %v1386 = vmax.f32 %v1384, %v1385
    %v1387 = vrot.slane %v1386, 1
    %v1388 = vmax.f32 %v1386, %v1387
    %v1389 = vsel %vm1306, %v1292, -inf
    %v1390 = vsel %vm1308, %v1293, -inf
    %v1391 = vmax.f32 %v1389, %v1390
    %v1392 = vrot.slane %v1391, 4
    %v1393 = vmax.f32 %v1391, %v1392
    %v1394 = vrot.slane %v1393, 2
    %v1395 = vmax.f32 %v1393, %v1394
    %v1396 = vrot.slane %v1395, 1
    %v1397 = vmax.f32 %v1395, %v1396
    %v1398 = vsel %vm1306, %v1294, -inf
    %v1399 = vsel %vm1308, %v1295, -inf
    %v1400 = vmax.f32 %v1398, %v1399
    %v1401 = vrot.slane %v1400, 4
    %v1402 = vmax.f32 %v1400, %v1401
    %v1403 = vrot.slane %v1402, 2
    %v1404 = vmax.f32 %v1402, %v1403
    %v1405 = vrot.slane %v1404, 1
    %v1406 = vmax.f32 %v1404, %v1405
    %v1407 = vsel %vm1306, %v1296, -inf
    %v1408 = vsel %vm1308, %v1297, -inf
    %v1409 = vmax.f32 %v1407, %v1408
    %v1410 = vrot.slane %v1409, 4
    %v1411 = vmax.f32 %v1409, %v1410
    %v1412 = vrot.slane %v1411, 2
    %v1413 = vmax.f32 %v1411, %v1412
    %v1414 = vrot.slane %v1413, 1
    %v1415 = vmax.f32 %v1413, %v1414
    %v1416 = vsel %vm1306, %v1298, -inf
    %v1417 = vsel %vm1308, %v1299, -inf
    %v1418 = vmax.f32 %v1416, %v1417
    %v1419 = vrot.slane %v1418, 4
    %v1420 = vmax.f32 %v1418, %v1419
    %v1421 = vrot.slane %v1420, 2
    %v1422 = vmax.f32 %v1420, %v1421
    %v1423 = vrot.slane %v1422, 1
    %v1424 = vmax.f32 %v1422, %v1423
    %v1425 = vsel %vm1306, %v1300, -inf
    %v1426 = vsel %vm1308, %v1301, -inf
    %v1427 = vmax.f32 %v1425, %v1426
    %v1428 = vrot.slane %v1427, 4
    %v1429 = vmax.f32 %v1427, %v1428
    %v1430 = vrot.slane %v1429, 2
    %v1431 = vmax.f32 %v1429, %v1430
    %v1432 = vrot.slane %v1431, 1
    %v1433 = vmax.f32 %v1431, %v1432
    %v1434 = vsel %vm1306, %v1302, -inf
    %v1435 = vsel %vm1308, %v1303, -inf
    %v1436 = vmax.f32 %v1434, %v1435
    %v1437 = vrot.slane %v1436, 4
    %v1438 = vmax.f32 %v1436, %v1437
    %v1439 = vrot.slane %v1438, 2
    %v1440 = vmax.f32 %v1438, %v1439
    %v1441 = vrot.slane %v1440, 1
    %v1442 = vmax.f32 %v1440, %v1441
    %v1443 = vsel %vm1306, %v1304, -inf
    %v1444 = vsel %vm1308, %v1305, -inf
    %v1445 = vmax.f32 %v1443, %v1444
    %v1446 = vrot.slane %v1445, 4
    %v1447 = vmax.f32 %v1445, %v1446
    %v1448 = vrot.slane %v1447, 2
    %v1449 = vmax.f32 %v1447, %v1448
    %v1450 = vrot.slane %v1449, 1
    %v1451 = vmax.f32 %v1449, %v1450
    %vm1468 = vcmask 1041409
    %v1469 = vsel %vm1468, %v903, %v894
    %vm1470 = vcmask 1042434
    %v1471 = vsel %vm1470, %v912, %v1469
    %vm1472 = vcmask 1043459
    %v1473 = vsel %vm1472, %v921, %v1471
    %vm1474 = vcmask 1044484
    %v1475 = vsel %vm1474, %v930, %v1473
    %vm1476 = vcmask 1045509
    %v1477 = vsel %vm1476, %v939, %v1475
    %vm1478 = vcmask 1046534
    %v1479 = vsel %vm1478, %v948, %v1477
    %vm1480 = vcmask 1047559
    %v1481 = vsel %vm1480, %v957, %v1479
    %v1482 = vsel %vm1468, %v975, %v966
    %v1483 = vsel %vm1470, %v984, %v1482
    %v1484 = vsel %vm1472, %v993, %v1483
    %v1485 = vsel %vm1474, %v1002, %v1484
    %v1486 = vsel %vm1476, %v1011, %v1485
    %v1487 = vsel %vm1478, %v1020, %v1486
    %v1488 = vsel %vm1480, %v1029, %v1487
    %1489 = vrot.lane.b32.xlu0 %v1481, 32
    %v1490 = vpop.permute.xlu0 %1489
    %1491 = vrot.lane.b32.xlu0 %v1488, 32
    %v1492 = vpop.permute.xlu0 %1491
    %v1511 = vsel %vm1468, %v1325, %v1316
    %v1512 = vsel %vm1470, %v1334, %v1511
    %v1513 = vsel %vm1472, %v1343, %v1512
    %v1514 = vsel %vm1474, %v1352, %v1513
    %v1515 = vsel %vm1476, %v1361, %v1514
    %v1516 = vsel %vm1478, %v1370, %v1515
    %v1517 = vsel %vm1480, %v1379, %v1516
    %v1518 = vsel %vm1468, %v1397, %v1388
    %v1519 = vsel %vm1470, %v1406, %v1518
    %v1520 = vsel %vm1472, %v1415, %v1519
    %v1521 = vsel %vm1474, %v1424, %v1520
    %v1522 = vsel %vm1476, %v1433, %v1521
    %v1523 = vsel %vm1478, %v1442, %v1522
    %v1524 = vsel %vm1480, %v1451, %v1523
    %v1527 = vsel %vm884, %v603, %v1490
    %v1528 = vsel %vm884, %v604, %v1492
    %vm1529 = vcmask 523264
    %v1530 = vsel %vm1529, %v1527, %v1517
    %v1531 = vsel %vm1529, %v1528, %v1524
    %vm1532 = vcmask 785408
    %1533 = vst.msk [vmem:[#allocation2] sm:$0xff] %vm1532, %v1530
    %1534 = vst.msk [vmem:[#allocation2 + $0x8] sm:$0xff] %vm1532, %v1531
    // Predicated region
    $region18: #{tpu_custom_call.1} parent=1 // pred_check
      _
    $region19: #{tpu_custom_call.1} parent=1 // pred_check_branch
      %1536 = sbr.rel (0) target = $region21
    $region20: #{tpu_custom_call.1} parent=1 // pred_region
      %s1538 = ssub.s32 256, 256
      %1539 = vsyncadd [#allocation3], %s1538
      %s1540 = sshll.u32 [#allocation2], 4
      %s1541 = int_to_ptr.vmem [resolvable:$true] %s1540
      %1546 = dma.vmem_to_hbm [thread:$0]  %s1541, 256, %s4, [#allocation3], 128, 128, 8
    $region21: #{tpu_custom_call.1} parent=1 // pred_fallthru
      _
    // Predicated region
    $region22: #{tpu_custom_call.1} parent=1 // pred_check
      _
    $region23: #{tpu_custom_call.1} parent=1 // pred_check_branch
      %1548 = sbr.rel (0) target = $region25
    $region24: #{tpu_custom_call.1} parent=1 // pred_region
      %1549 = dma.done [#allocation3], 256
    $region25: #{tpu_custom_call.1} parent=1 // pred_fallthru
      _
    %1550 = vsyncpa [#allocation3], 1

</llo_original>
